<compile_context>
chip_gen: v5e
topology: v5e:2x2
jax: 0.10.0
libtpu: 0.0.40
codegen_flags: <defaults>
</compile_context>

<pallas_src>
import functools

import jax
import jax.numpy as jnp
import numpy as np
from jax.experimental import pallas as pl
from jax.experimental.pallas import tpu as pltpu


def _wce_kernel(logits_ref, target_ref, wm_t_ref, out_ref, acc_ref, *,
                alpha, eps, n_valid, block_b, blocks_per_partial):
    # NOTE: the accumulator reset at b_id == 0 and writeback at b_id == last rely
    # on the batch-block axis being the innermost ("arbitrary") grid axis and the
    # partial axis being outermost / core-sharded. Keep the grid order if editing.
    c_id = pl.program_id(0)      # partial index (one per TensorCore on 2-TC chips)
    b_id = pl.program_id(1)      # batch-block index within this partial

    @pl.when(b_id == 0)
    def _():
        acc_ref[...] = jnp.zeros_like(acc_ref)

    x = logits_ref[...].astype(jnp.float32)                  # (C, TB)
    tgt = target_ref[...]                                    # (1, TB) int32
    C, TB = x.shape

    # Global sample position of every lane.  Padded / out-of-bounds lanes must
    # contribute nothing; the tail block may read past the array end (no HBM pad
    # beyond 128-lane alignment), so clamp garbage to 0 *before* exp/log so no
    # NaN/Inf can survive the 0x mask.
    lane = jax.lax.broadcasted_iota(jnp.int32, (C, TB), 1)
    pos = (c_id * blocks_per_partial + b_id) * block_b + lane
    valid = pos < n_valid                                    # (C, TB) bool
    x = jnp.where(valid, x, 0.0) + eps

    cls = jax.lax.broadcasted_iota(jnp.int32, (C, TB), 0)
    onehot = jnp.where((cls == tgt) & valid, 1.0, 0.0)       # (C, TB) f32

    # --- single softmax pass (eps is a uniform shift, so probs == softmax(logits)
    #     and log_probs == log_softmax(logits + eps), matching the PyTorch module) ---
    m = jnp.max(x, axis=0, keepdims=True)                    # (1, TB) sublane reduce
    e = jnp.exp(x - m)                                       # (C, TB)
    s = jnp.sum(e, axis=0, keepdims=True)                    # (1, TB)
    log_s = jnp.log(s)                                       # (1, TB)
    log_probs = (x - m) - log_s                              # (C, TB)
    # log(1 - p + eps) with p = e/s, without any reciprocal/divide:
    #   log((s - e + eps*s)/s) = log(s - e + eps*s) - log(s)
    log_om = jnp.log(s - e + eps * s) - log_s                # (C, TB)

    # w_rows[c, b] = W[target_b, c] = (W.T @ onehot)[c, b]  (tiny MXU matmul; the
    # MXU/extended slot is otherwise idle here)
    w_rows = jnp.dot(wm_t_ref[...], onehot, preferred_element_type=jnp.float32)

    # Merged vector accumulator (alpha folded per block); reduced once at the end.
    acc_ref[...] += alpha * (onehot * log_probs) + (1.0 - alpha) * (w_rows * log_om)

    @pl.when(b_id == pl.num_programs(1) - 1)
    def _():
        loss_partial = -jnp.sum(acc_ref[...]) / n_valid
        # broadcast the scalar into the (1, 8, 128) output block; wrapper reads [c,0,0]
        out_ref[...] = jnp.zeros(out_ref.shape, jnp.float32) + loss_partial


def make_weighted_cross_entropy(weight_matrix, alpha, eps=1e-10):
    """Returns a jitted fn(logits (B, C) float, target (B,) int) -> scalar loss."""
    wm_t = jnp.asarray(weight_matrix, jnp.float32).T         # (C, C), VMEM-resident
    C = wm_t.shape[0]
    alpha = float(alpha)
    eps = float(eps)

    kind = jax.devices()[0].device_kind.lower()
    is_v7 = "v7" in kind
    two_tc = is_v7 or ("v4" in kind) or ("v5p" in kind)      # chips with 2 TensorCores
    max_tb = 32768 if is_v7 else 65536                       # v7x: only 64 MiB VMEM/TC
    vmem_limit = (48 << 20) if is_v7 else (96 << 20)

    @jax.jit
    def loss_fn(logits, target):
        B, c_in = logits.shape
        assert c_in == C
        LANE = 128
        b128 = pl.cdiv(B, LANE) * LANE        # pad batch only to a lane multiple
        tb = min(max_tb, b128)                # lane-dim batch tile
        nb = pl.cdiv(b128, tb)                # batch blocks actually needed
        n_part = 2 if (two_tc and nb >= 2) else 1
        bpp = pl.cdiv(nb, n_part)             # batch blocks per partial

        # class-major layout (C on sublanes, batch on lanes); keep native logits
        # dtype (f32 compute happens in-kernel).  Under jit the transpose + tiny
        # tail pad fuse into a single copy.
        logits_t = jnp.pad(jnp.transpose(logits), ((0, 0), (0, b128 - B)))
        target2d = jnp.pad(target.reshape(1, B).astype(jnp.int32),
                           ((0, 0), (0, b128 - B)))

        def block_idx(c, i):
            # clamp so the grid never addresses a fully out-of-bounds block; any
            # duplicate block contributes 0 via the in-kernel position mask.
            return jnp.minimum(c * bpp + i, nb - 1)

        kernel = functools.partial(
            _wce_kernel, alpha=alpha, eps=eps, n_valid=B,
            block_b=tb, blocks_per_partial=bpp)

        out = pl.pallas_call(
            kernel,
            out_shape=jax.ShapeDtypeStruct((n_part, 8, 128), jnp.float32),
            grid=(n_part, bpp),
            in_specs=[
                pl.BlockSpec((C, tb), lambda c, i: (0, block_idx(c, i))),  # logits
                pl.BlockSpec((1, tb), lambda c, i: (0, block_idx(c, i))),  # target
                pl.BlockSpec((C, C), lambda c, i: (0, 0)),                 # W.T
            ],
            out_specs=pl.BlockSpec((1, 8, 128), lambda c, i: (c, 0, 0)),
            scratch_shapes=[pltpu.VMEM((C, tb), jnp.float32)],
            compiler_params=pltpu.CompilerParams(
                dimension_semantics=("parallel", "arbitrary"),
                vmem_limit_bytes=vmem_limit),
            cost_estimate=pl.CostEstimate(
                flops=int(B * (15 * C + 2 * C * C)),
                transcendentals=int(B * (2 * C + 1)),
                bytes_accessed=int(B * C * logits.dtype.itemsize + 4 * B
                                   + n_part * 8 * 128 * 4)),
        )(logits_t, target2d, wm_t)

        return jnp.sum(out[:, 0, 0])

    return loss_fn


def weighted_cross_entropy(logits, target, weight_matrix, alpha, eps=1e-10):
    """Convenience one-shot wrapper (builds the jitted fn each call)."""
    return make_weighted_cross_entropy(weight_matrix, alpha, eps)(logits, target)


def make_weight_matrix():
    wm = np.array(
        [[0, 1, 6, 10, 10, 10, 10, 10],
         [1, 0, 3, 10, 10, 10, 10, 10],
         [6, 3, 0, 2, 9, 10, 10, 10],
         [10, 10, 2, 0, 9, 9, 10, 10],
         [10, 10, 9, 9, 0, 8, 8, 8],
         [10, 10, 10, 9, 8, 0, 9, 8],
         [10, 10, 10, 10, 8, 9, 0, 9],
         [10, 10, 10, 10, 8, 8, 9, 0]], dtype=np.float64)
    wm = wm / np.max(wm)
    return jnp.asarray(wm, dtype=jnp.float32)


def reference(logits, target, wm, alpha, eps=1e-10):
    # pure-JAX reference of the PyTorch forward
    probs = jax.nn.softmax(logits, axis=1)
    log_probs = jax.nn.log_softmax(logits + eps, axis=1)
    onehot = jax.nn.one_hot(target, 8, dtype=jnp.float32)
    ce = -jnp.mean(jnp.sum(onehot * log_probs, axis=1))
    w_rows = onehot @ wm
    wce = -jnp.mean(jnp.sum(w_rows * jnp.log(1.0 - probs + eps), axis=1))
    return alpha * ce + (1 - alpha) * wce


if __name__ == "__main__":
    alpha = 0.7
    eps = 1e-10
    B, C = 16, 8

    key = jax.random.PRNGKey(0)
    k1, k2 = jax.random.split(key)
    logits = jax.random.normal(k1, (B, C), dtype=jnp.float32)
    target = jax.random.randint(k2, (B,), 0, C, dtype=jnp.int32)
    wm = make_weight_matrix()

    loss_fn = make_weighted_cross_entropy(wm, alpha, eps)
    loss = jax.block_until_ready(loss_fn(logits, target))

    ref = reference(logits, target, wm, alpha, eps)
    assert jnp.allclose(loss, ref, rtol=1e-5, atol=1e-5), (loss, ref)

    print("KERNEL_OK")
</pallas_src>

<mosaic_0001>
module attributes {stable_mosaic.version = 11 : i64} {
  func.func @_wce_kernel(%arg0: i32, %arg1: i32, %arg2: memref<8x128xf32, #tpu.memory_space<vmem>>, %arg3: memref<1x128xi32, #tpu.memory_space<vmem>>, %arg4: memref<8x8xf32, #tpu.memory_space<vmem>>, %arg5: memref<1x8x128xf32, #tpu.memory_space<vmem>>, %arg6: memref<8x128xf32, #tpu.memory_space<vmem>>) attributes {dimension_semantics = [#tpu.dimension_semantics<parallel>, #tpu.dimension_semantics<arbitrary>], iteration_bounds = array<i64: 1, 1>, scalar_prefetch = 0 : i64, scratch_operands = 1 : i64, tpu.core_type = #tpu.core_type<tc>, window_params = [{transform_indices = @transform_0, window_bounds = array<i64: 8, 128>}, {transform_indices = @transform_1, window_bounds = array<i64: 1, 128>}, {pipeline_mode = #tpu.pipeline_mode<synchronous>, transform_indices = @transform_2, window_bounds = array<i64: 8, 8>}, {transform_indices = @transform_3, window_bounds = array<i64: 1, 8, 128>}]} {
    %c0_i32 = arith.constant 0 : i32
    %0 = arith.cmpi eq, %arg1, %c0_i32 : i32
    %1 = arith.extui %0 : i1 to i32
    %c0_i32_0 = arith.constant 0 : i32
    %2 = arith.cmpi ne, %1, %c0_i32_0 : i32
    scf.if %2 {
      %cst_21 = arith.constant 0.000000e+00 : f32
      %60 = vector.broadcast %cst_21 : f32 to vector<8x128xf32>
      %c0_22 = arith.constant 0 : index
      %c0_23 = arith.constant 0 : index
      %61 = vector.load %arg6[%c0_22, %c0_23] : memref<8x128xf32, #tpu.memory_space<vmem>>, vector<8x128xf32>
      tpu.vector_store %arg6[%c0_22, %c0_23], %60 {strides = array<i32>} : memref<8x128xf32, #tpu.memory_space<vmem>>, vector<8x128xf32>,
    } else {
    }
    %c0 = arith.constant 0 : index
    %c0_1 = arith.constant 0 : index
    %3 = vector.load %arg2[%c0, %c0_1] : memref<8x128xf32, #tpu.memory_space<vmem>>, vector<8x128xf32>
    %c0_2 = arith.constant 0 : index
    %c0_3 = arith.constant 0 : index
    %4 = vector.load %arg3[%c0_2, %c0_3] : memref<1x128xi32, #tpu.memory_space<vmem>>, vector<1x128xi32>
    %5 = tpu.iota {dimensions = array<i32: 1>} : vector<8x128xi32>
    %c1_i32 = arith.constant 1 : i32
    %6 = arith.muli %arg0, %c1_i32 : i32
    %7 = arith.addi %6, %arg1 : i32
    %c128_i32 = arith.constant 128 : i32
    %8 = arith.muli %7, %c128_i32 : i32
    %9 = vector.broadcast %8 : i32 to vector<8x128xi32>
    %10 = arith.addi %9, %5 : vector<8x128xi32>
    %c16_i32 = arith.constant 16 : i32
    %11 = vector.broadcast %c16_i32 : i32 to vector<8x128xi32>
    %12 = arith.cmpi slt, %10, %11 : vector<8x128xi32>
    %cst = arith.constant 0.000000e+00 : f32
    %13 = vector.broadcast %cst : f32 to vector<8x128xf32>
    %14 = arith.select %12, %3, %13 : vector<8x128xi1>, vector<8x128xf32>
    %cst_4 = arith.constant 1.000000e-10 : f32
    %15 = vector.broadcast %cst_4 : f32 to vector<8x128xf32>
    %16 = arith.addf %14, %15 : vector<8x128xf32>
    %17 = tpu.iota {dimensions = array<i32: 0>} : vector<8x128xi32>
    %18 = vector.broadcast %4 : vector<1x128xi32> to vector<8x128xi32>
    %19 = arith.cmpi eq, %17, %18 : vector<8x128xi32>
    %20 = arith.andi %19, %12 : vector<8x128xi1>
    %cst_5 = arith.constant 1.000000e+00 : f32
    %cst_6 = arith.constant 0.000000e+00 : f32
    %21 = vector.broadcast %cst_5 : f32 to vector<8x128xf32>
    %22 = vector.broadcast %cst_6 : f32 to vector<8x128xf32>
    %23 = arith.select %20, %21, %22 : vector<8x128xi1>, vector<8x128xf32>
    %cst_7 = arith.constant dense<0xFF800000> : vector<128xf32>
    %24 = vector.multi_reduction <maximumf>, %16, %cst_7 [0] : vector<8x128xf32> to vector<128xf32>
    %25 = vector.shape_cast %24 : vector<128xf32> to vector<1x128xf32>
    %26 = vector.broadcast %25 : vector<1x128xf32> to vector<8x128xf32>
    %27 = arith.subf %16, %26 : vector<8x128xf32>
    %28 = math.exp %27 : vector<8x128xf32>
    %cst_8 = arith.constant dense<0.000000e+00> : vector<128xf32>
    %29 = vector.multi_reduction <add>, %28, %cst_8 [0] : vector<8x128xf32> to vector<128xf32>
    %30 = vector.shape_cast %29 : vector<128xf32> to vector<1x128xf32>
    %31 = math.log %30 : vector<1x128xf32>
    %32 = vector.broadcast %25 : vector<1x128xf32> to vector<8x128xf32>
    %33 = arith.subf %16, %32 : vector<8x128xf32>
    %34 = vector.broadcast %31 : vector<1x128xf32> to vector<8x128xf32>
    %35 = arith.subf %33, %34 : vector<8x128xf32>
    %36 = vector.broadcast %30 : vector<1x128xf32> to vector<8x128xf32>
    %37 = arith.subf %36, %28 : vector<8x128xf32>
    %cst_9 = arith.constant 1.000000e-10 : f32
    %38 = vector.broadcast %cst_9 : f32 to vector<1x128xf32>
    %39 = arith.mulf %38, %30 : vector<1x128xf32>
    %40 = vector.broadcast %39 : vector<1x128xf32> to vector<8x128xf32>
    %41 = arith.addf %37, %40 : vector<8x128xf32>
    %42 = math.log %41 : vector<8x128xf32>
    %43 = vector.broadcast %31 : vector<1x128xf32> to vector<8x128xf32>
    %44 = arith.subf %42, %43 : vector<8x128xf32>
    %c0_10 = arith.constant 0 : index
    %c0_11 = arith.constant 0 : index
    %45 = vector.load %arg4[%c0_10, %c0_11] : memref<8x8xf32, #tpu.memory_space<vmem>>, vector<8x8xf32>
    %cst_12 = arith.constant dense<0.000000e+00> : vector<8x128xf32>
    %46 = tpu.matmul %45, %23, %cst_12 {dimension_numbers = #tpu.dot_dimension_numbers<[1], [0], [0], [1], [0, 0, 1, 1], [], []>} : vector<8x8xf32>, vector<8x128xf32>, vector<8x128xf32> -> vector<8x128xf32>
    %c0_13 = arith.constant 0 : index
    %c0_14 = arith.constant 0 : index
    %47 = vector.load %arg6[%c0_13, %c0_14] : memref<8x128xf32, #tpu.memory_space<vmem>>, vector<8x128xf32>
    %48 = arith.mulf %23, %35 : vector<8x128xf32>
    %cst_15 = arith.constant 0.699999988 : f32
    %49 = vector.broadcast %cst_15 : f32 to vector<8x128xf32>
    %50 = arith.mulf %49, %48 : vector<8x128xf32>
    %51 = arith.mulf %46, %44 : vector<8x128xf32>
    %cst_16 = arith.constant 3.000000e-01 : f32
    %52 = vector.broadcast %cst_16 : f32 to vector<8x128xf32>
    %53 = arith.mulf %52, %51 : vector<8x128xf32>
    %54 = arith.addf %50, %53 : vector<8x128xf32>
    %55 = arith.addf %47, %54 : vector<8x128xf32>
    %c0_17 = arith.constant 0 : index
    %c0_18 = arith.constant 0 : index
    %56 = vector.load %arg6[%c0_17, %c0_18] : memref<8x128xf32, #tpu.memory_space<vmem>>, vector<8x128xf32>
    tpu.vector_store %arg6[%c0_17, %c0_18], %55 {strides = array<i32>} : memref<8x128xf32, #tpu.memory_space<vmem>>, vector<8x128xf32>,
    %c0_i32_19 = arith.constant 0 : i32
    %57 = arith.cmpi eq, %arg1, %c0_i32_19 : i32
    %58 = arith.extui %57 : i1 to i32
    %c0_i32_20 = arith.constant 0 : i32
    %59 = arith.cmpi ne, %58, %c0_i32_20 : i32
    scf.if %59 {
      %c0_21 = arith.constant 0 : index
      %c0_22 = arith.constant 0 : index
      %60 = vector.load %arg6[%c0_21, %c0_22] : memref<8x128xf32, #tpu.memory_space<vmem>>, vector<8x128xf32>
      %61 = vector.shape_cast %60 : vector<8x128xf32> to vector<1x8x128xf32>
      %cst_23 = arith.constant dense<0.000000e+00> : vector<1xf32>
      %62 = vector.multi_reduction <add>, %61, %cst_23 [1, 2] : vector<1x8x128xf32> to vector<1xf32>
      %63 = vector.shape_cast %62 : vector<1xf32> to vector<1x1x1xf32>
      %64 = vector.extract %63[0, 0, 0] : f32 from vector<1x1x1xf32>
      %cst_24 = arith.constant 0.000000e+00 : f32
      %65 = arith.subf %cst_24, %64 : f32
      %cst_25 = arith.constant 1.600000e+01 : f32
      %66 = arith.divf %65, %cst_25 : f32
      %cst_26 = arith.constant 0.000000e+00 : f32
      %67 = vector.broadcast %cst_26 : f32 to vector<1x8x128xf32>
      %68 = vector.broadcast %66 : f32 to vector<1x8x128xf32>
      %69 = arith.addf %67, %68 : vector<1x8x128xf32>
      %c0_27 = arith.constant 0 : index
      %c0_28 = arith.constant 0 : index
      %c0_29 = arith.constant 0 : index
      %70 = vector.load %arg5[%c0_27, %c0_28, %c0_29] : memref<1x8x128xf32, #tpu.memory_space<vmem>>, vector<1x8x128xf32>
      tpu.vector_store %arg5[%c0_27, %c0_28, %c0_29], %69 {strides = array<i32>} : memref<1x8x128xf32, #tpu.memory_space<vmem>>, vector<1x8x128xf32>,
    } else {
    }
    return
  }
  func.func @transform_0(%arg0: i32, %arg1: i32) -> (i32, i32) {
    %c1_i32 = arith.constant 1 : i32
    %0 = arith.muli %arg0, %c1_i32 : i32
    %1 = arith.addi %0, %arg1 : i32
    %c0_i32 = arith.constant 0 : i32
    %2 = arith.minsi %1, %c0_i32 : i32
    %c0_i32_0 = arith.constant 0 : i32
    %c0_i32_1 = arith.constant 0 : i32
    return %c0_i32_0, %2 : i32, i32
  }
  func.func @transform_1(%arg0: i32, %arg1: i32) -> (i32, i32) {
    %c1_i32 = arith.constant 1 : i32
    %0 = arith.muli %arg0, %c1_i32 : i32
    %1 = arith.addi %0, %arg1 : i32
    %c0_i32 = arith.constant 0 : i32
    %2 = arith.minsi %1, %c0_i32 : i32
    %c0_i32_0 = arith.constant 0 : i32
    %c0_i32_1 = arith.constant 0 : i32
    return %c0_i32_0, %2 : i32, i32
  }
  func.func @transform_2(%arg0: i32, %arg1: i32) -> (i32, i32) {
    %c0_i32 = arith.constant 0 : i32
    %c0_i32_0 = arith.constant 0 : i32
    %c0_i32_1 = arith.constant 0 : i32
    return %c0_i32, %c0_i32_0 : i32, i32
  }
  func.func @transform_3(%arg0: i32, %arg1: i32) -> (i32, i32, i32) {
    %c0_i32 = arith.constant 0 : i32
    %c0_i32_0 = arith.constant 0 : i32
    %c0_i32_1 = arith.constant 0 : i32
    return %arg0, %c0_i32, %c0_i32_0 : i32, i32, i32
  }
}

</mosaic_0001>

<llo_original>
// kernel: loss_fn.1
$region0: #{loss_fn.1}
  #allocation0 [shape = 'u32[]', space=smem, size = 0x4, offset = 0x4, fixed_abs, tag = 'smem constant byte address 0x4 - core index']
  #allocation1 [shape = 'u32[72,128]{1,0:T(1,128)}', space=vmem, size = 0x9000, scoped, tag = 'internal scratch']
  #allocation2 [shape = 'f32[8,128]{1,0:T(8,128)}', space=vmem, size = 0x1000, scoped, tag = 'scratch operand']
  %s0 = inlined_call_operand.vmem [shape: f32[8,128], index: 0, kind: input, shape index: {}]
  %s1 = inlined_call_operand.vmem [shape: s32[1,128], index: 1, kind: input, shape index: {}]
  %s2 = inlined_call_operand.vmem [shape: f32[8,8], index: 2, kind: input, shape index: {}]
  %s3 = inlined_call_operand.vmem [shape: f32[1,8,128], index: 3, kind: output, shape index: {}]
  %s4 = sld [smem:[#allocation0]]
  $region30: #{loss_fn.1} parent=0
    _
  %s6 = ssub.s32 1, %s4
  %s7 = scalar_select 0, %s6, %s4
  // Predicated region
  $region2: #{loss_fn.1} parent=0 // pred_check
    _
  $region3: #{loss_fn.1} parent=0 // pred_check_branch
    %9 = sbr.rel (0) target = $region5
  $region4: #{loss_fn.1} parent=0 // pred_region
    %s10 = sadd.s32 0, 0
    %p11 = scmp.lt.s32.totalorder %s10, 0
    %s12 = scalar_select %p11, %s10, 0
    %p13 = scmp.lt.s32.totalorder %s12, 0
    %s14 = scalar_select %p13, %s12, 0
    %s15 = smul.addr %s14, 8
    %s16 = scalar_lea.vmem %s0, %s15
    %s17 = sadd.s32 0, 0
    %p18 = scmp.lt.s32.totalorder %s17, 0
    %s19 = scalar_select %p18, %s17, 0
  $region5: #{loss_fn.1} parent=0 // pred_fallthru
    _
  // Predicated region
  $region6: #{loss_fn.1} parent=0 // pred_check
    _
  $region7: #{loss_fn.1} parent=0 // pred_check_branch
    %21 = sbr.rel (0) target = $region9
  $region8: #{loss_fn.1} parent=0 // pred_region
    %s22 = sadd.s32 0, 0
    %p23 = scmp.lt.s32.totalorder %s22, 0
    %s24 = scalar_select %p23, %s22, 0
    %p25 = scmp.lt.s32.totalorder %s24, 0
    %s26 = scalar_select %p25, %s24, 0
    %s27 = scalar_lea.vmem %s1, %s26
    %s28 = sadd.s32 0, 0
    %p29 = scmp.lt.s32.totalorder %s28, 0
    %s30 = scalar_select %p29, %s28, 0
  $region9: #{loss_fn.1} parent=0 // pred_fallthru
    _
  // Predicated region
  $region10: #{loss_fn.1} parent=0 // pred_check
    _
  $region11: #{loss_fn.1} parent=0 // pred_check_branch
    %32 = sbr.rel (0) target = $region13
  $region12: #{loss_fn.1} parent=0 // pred_region
    _
  $region13: #{loss_fn.1} parent=0 // pred_fallthru
    _
  %s33 = sadd.s32 0, 0
  %p34 = scmp.lt.s32.totalorder %s33, 0
  %s35 = scalar_select %p34, %s33, 0
  %p36 = scmp.lt.s32.totalorder %s35, 0
  %s37 = scalar_select %p36, %s35, 0
  %s38 = smul.addr %s37, 8
  %s39 = scalar_lea.vmem %s0, %s38
  %s40 = sadd.s32 0, 0
  %p41 = scmp.lt.s32.totalorder %s40, 0
  %s42 = scalar_select %p41, %s40, 0
  %p43 = scmp.lt.s32.totalorder %s42, 0
  %s44 = scalar_select %p43, %s42, 0
  %s45 = scalar_lea.vmem %s1, %s44
  %s46 = sadd.s32 0, 0
  %p47 = scmp.lt.s32.totalorder %s46, 0
  %s48 = scalar_select %p47, %s46, 0
  %p49 = scmp.lt.s32.totalorder %s48, 0
  %s50 = scalar_select %p49, %s48, 0
  %s51 = smul.addr %s50, 8
  %s52 = scalar_lea.vmem %s0, %s51
  %s53 = sadd.s32 0, 0
  %p54 = scmp.lt.s32.totalorder %s53, 0
  %s55 = scalar_select %p54, %s53, 0
  %s56 = sadd.s32 0, 0
  %p57 = scmp.lt.s32.totalorder %s56, 0
  %s58 = scalar_select %p57, %s56, 0
  %p59 = scmp.lt.s32.totalorder %s58, 0
  %s60 = scalar_select %p59, %s58, 0
  %s61 = scalar_lea.vmem %s1, %s60
  %s62 = sadd.s32 0, 0
  %p63 = scmp.lt.s32.totalorder %s62, 0
  %s64 = scalar_select %p63, %s62, 0
  %p65 = scmp.eq.s32.totalorder 0, 0
  // Predicated region
  $region14: #{loss_fn.1} parent=0 // pred_check
    %p66 = pneg %p65
  $region15: #{loss_fn.1} parent=0 // pred_check_branch
    %68 = sbr.rel (%p66) target = $region17
  $region16: #{loss_fn.1} parent=0 // pred_region
    %69 = vst [vmem:[#allocation2] sm:$0xff] 0.0
  $region17: #{loss_fn.1} parent=0 // pred_fallthru
    _
  %v70 = vld [vmem:[%s52] sm:$0xff]
  %v71 = vld [vmem:[%s61] sm:$0x1]
  %v72 = vlaneseq
  %v73 = vand.u32 %v72, 127
  %s74 = sadd.s32 0, 0
  %s75 = smul.u32 %s74, 128
  %v76 = vstv %s75
  %v77 = vadd.s32 %v76, %v73
  %vm78 = vcmp.lt.s32.totalorder %v77, 16
  %v79 = vsel %vm78, %v70, 0.0
  %v80 = vadd.f32 %v79, 1e-10
  %v81 = vlaneseq
  %v82 = vshrl.u32 %v81, 7
  %v83 = vperm.slane %v71, 0
  %vm84 = vcmp.eq.s32.totalorder %v82, %v83
  %vm85 = vmand %vm84, %vm78
  %v86 = vsel %vm85, 1.0, 0.0
  %v87 = vrot.slane %v80, 4
  %v88 = vmax.f32 %v80, %v87
  %v89 = vrot.slane %v88, 2
  %v90 = vmax.f32 %v88, %v89
  %v91 = vrot.slane %v90, 1
  %v92 = vmax.f32 %v90, %v91
  %v93 = vsub.f32 %v80, %v92
  %v94 = vmul.f32 %v93, 1.442695
  %v95 = vpow.pop %v94
  %v96 = vrot.slane %v95, 4
  %v97 = vadd.f32 %v95, %v96
  %v98 = vrot.slane %v97, 2
  %v99 = vadd.f32 %v97, %v98
  %v100 = vrot.slane %v99, 1
  %v101 = vadd.f32 %v99, %v100
  %v102 = vlog2.pop %v101
  %v103 = vmul.f32 %v102, 0.6931472
  %v104 = vsub.f32 %v93, %v103
  %v105 = vsub.f32 %v101, %v95
  %v106 = vmul.f32 %v101, 1e-10
  %v107 = vadd.f32 %v105, %v106
  %v108 = vlog2.pop %v107
  %v109 = vmul.f32 %v108, 0.6931472
  %v110 = vsub.f32 %v109, %v103
  %v111 = vld [vmem:[%s2] sm:$0xff]
  %vm112 = vcmask 64512
  %v114 = vsel %vm112, %v111, 0
  %116 = vmatpush.msra.mxu0 0.0
  %117 = vmatpush.msra.mxu0 0.0
  %118 = vmatpush.msra.mxu0 0.0
  %119 = vmatpush.msra.mxu0 0.0
  %120 = vmatpush.msra.mxu0 0.0
  %121 = vmatpush.msra.mxu0 0.0
  %122 = vmatpush.msra.mxu0 0.0
  %123 = vmatpush.msra.mxu0 0.0
  %124 = vmatpush.msra.mxu0 0.0
  %125 = vmatpush.msra.mxu0 0.0
  %126 = vmatpush.msra.mxu0 0.0
  %127 = vmatpush.msra.mxu0 0.0
  %128 = vmatpush.msra.mxu0 0.0
  %129 = vmatpush.msra.mxu0 0.0
  %130 = vmatpush.msra.mxu0 0.0
  %131 = vmatpush.msra.mxu0 %v86
  %132 = vmatmul.f32.gmra.mxu0 %v114
  %v133 = vpop.f32.mrf.mxu0
  %v134 = vadd.f32 0.0, %v133
  %135 = vdwg.mxu0
  %v136 = vld [vmem:[#allocation2] sm:$0xff]
  %v137 = vmul.f32 %v86, %v104
  %v138 = vmul.f32 %v137, 0.7
  %v139 = vmul.f32 %v134, %v110
  %v140 = vmul.f32 %v139, 0.3
  %v141 = vadd.f32 %v138, %v140
  %v142 = vadd.f32 %v136, %v141
  %143 = vst [vmem:[#allocation2] sm:$0xff] %v142
  // Predicated region
  $region18: #{loss_fn.1} parent=0 // pred_check
    %p144 = pneg %p65
  $region19: #{loss_fn.1} parent=0 // pred_check_branch
    %146 = sbr.rel (%p144) target = $region21
  $region20: #{loss_fn.1} parent=0 // pred_region
    %v147 = vld [vmem:[#allocation2] sm:$0xff]
    %148 = vadd.xlane.f32.xlu0 %v147
    %v149 = vpop.xlane.xlu0 %148
    %v150 = vrot.slane %v149, 4
    %v151 = vadd.f32 %v149, %v150
    %v152 = vrot.slane %v151, 2
    %v153 = vadd.f32 %v151, %v152
    %v154 = vrot.slane %v153, 1
    %v155 = vadd.f32 %v153, %v154
    %s156 = vtos %v155
    %s157 = ssub.f32 0.0, %s156
    %v158 = vrcp.pop 16.0
    %v159 = vmul.f32 16.0, %v158
    %v160 = vsub.f32 1.0, %v159
    %v161 = vmul.f32 %v158, %v160
    %v162 = vadd.f32 %v158, %v161
    %vm163 = vweird.f32 %v158
    %v164 = vsel %vm163, %v158, %v162
    %s165 = vtos %v164
    %s166 = smul.f32 %s157, %s165
    %v167 = vstv %s166
    %v168 = vadd.f32 %v167, 0.0
    %169 = vst [vmem:[%s3] sm:$0xff] %v168
  $region21: #{loss_fn.1} parent=0 // pred_fallthru
    _
  // Predicated region
  $region22: #{loss_fn.1} parent=0 // pred_check
    _
  $region23: #{loss_fn.1} parent=0 // pred_check_branch
    %171 = sbr.rel (0) target = $region25
  $region24: #{loss_fn.1} parent=0 // pred_region
    _
  $region25: #{loss_fn.1} parent=0 // pred_fallthru
    _
  // Predicated region
  $region26: #{loss_fn.1} parent=0 // pred_check
    _
  $region27: #{loss_fn.1} parent=0 // pred_check_branch
    %173 = sbr.rel (0) target = $region29
  $region28: #{loss_fn.1} parent=0 // pred_region
    _
  $region29: #{loss_fn.1} parent=0 // pred_fallthru
    _

</llo_original>
